<compile_context>
chip_gen: v5e
topology: v5e:2x2
jax: 0.10.0
libtpu: 0.0.40
codegen_flags: <defaults>
</compile_context>

<pallas_src>
import jax
import jax.numpy as jnp
from jax.experimental import pallas as pl
from jax.experimental.pallas import tpu as pltpu

IN_DIM = 28 * 28   # 784
H1 = 128
H2 = 64
OUT_DIM = 10

TILE_B_MAX = 1024  # safe under v5e's 16 MiB default scoped VMEM with f32 input


def _round_up(n, m):
    return ((n + m - 1) // m) * m


def _cdiv(a, b):
    return (a + b - 1) // b


def _mlp_kernel(x_ref, w1_ref, b1_ref, w2_ref, b2_ref, w3_ref, b3_ref, o_ref):
    # x_ref: (tile_b, 784) f32. Cast to bf16 in-kernel (free under the DMA)
    # instead of materializing a bf16 copy of the whole batch in HBM.
    x = x_ref[...].astype(jnp.bfloat16)
    # fc1 + relu (bf16 MXU, f32 accumulation)
    h1 = jnp.dot(x, w1_ref[...], preferred_element_type=jnp.float32) + b1_ref[...]
    h1 = jnp.maximum(h1, 0.0).astype(jnp.bfloat16)
    # fc2 + relu
    h2 = jnp.dot(h1, w2_ref[...], preferred_element_type=jnp.float32) + b2_ref[...]
    h2 = jnp.maximum(h2, 0.0).astype(jnp.bfloat16)
    # fc3 (no activation)
    o_ref[...] = jnp.dot(h2, w3_ref[...], preferred_element_type=jnp.float32) + b3_ref[...]


def _pick_tile_b(B):
    """Batch tile: full batch for tiny B; otherwise >=2 grid steps (v7x megacore),
    multiple of 8 sublanes, capped at TILE_B_MAX."""
    if B <= 16:
        return B  # block == full array dim, always legal
    return min(_round_up(_cdiv(B, 2), 8), TILE_B_MAX)


@jax.jit
def simple_nn_forward(x, params):
    """x: (B, 1, 28, 28) or any shape flattening to (B, 784). Returns (B, 10) f32."""
    w1, b1, w2, b2, w3, b3 = params

    # torch: x.view(-1, 784). Contiguous reshape is view-like; input stays f32.
    xf = x.reshape(-1, IN_DIM)
    B = xf.shape[0]

    tile_b = _pick_tile_b(B)
    grid = (_cdiv(B, tile_b),)  # partial last block masked by Pallas, no jnp.pad

    # bf16 weights (halves weight DMA, single-pass MXU); biases stay f32.
    w1b = w1.astype(jnp.bfloat16)
    w2b = w2.astype(jnp.bfloat16)
    w3b = w3.astype(jnp.bfloat16)

    x_spec = pl.BlockSpec((tile_b, IN_DIM), lambda i: (i, 0))
    const = lambda shape: pl.BlockSpec(shape, lambda i: (0, 0))  # VMEM-resident across steps
    out_spec = pl.BlockSpec((tile_b, OUT_DIM), lambda i: (i, 0))

    out = pl.pallas_call(
        _mlp_kernel,
        out_shape=jax.ShapeDtypeStruct((B, OUT_DIM), jnp.float32),
        grid=grid,
        in_specs=[
            x_spec,
            const((IN_DIM, H1)),
            const((1, H1)),
            const((H1, H2)),
            const((1, H2)),
            const((H2, OUT_DIM)),
            const((1, OUT_DIM)),
        ],
        out_specs=out_spec,
        compiler_params=pltpu.CompilerParams(
            dimension_semantics=("parallel",),  # shard batch steps across TCs on v7x
        ),
    )(xf, w1b, b1, w2b, b2, w3b, b3)

    return out


def init_params(key):
    """Deterministic init matching torch.nn.Linear default: U(-1/sqrt(fan_in), +1/sqrt(fan_in))."""
    def linear(k, fan_in, fan_out):
        kw, kb = jax.random.split(k)
        bound = 1.0 / jnp.sqrt(jnp.float32(fan_in))
        # stored as (in, out) so kernel does x @ W  (== x @ W_pt.T in torch)
        w = jax.random.uniform(kw, (fan_in, fan_out), jnp.float32, -bound, bound)
        b = jax.random.uniform(kb, (1, fan_out), jnp.float32, -bound, bound)
        return w, b

    k1, k2, k3 = jax.random.split(key, 3)
    w1, b1 = linear(k1, IN_DIM, H1)
    w2, b2 = linear(k2, H1, H2)
    w3, b3 = linear(k3, H2, OUT_DIM)
    return (w1, b1, w2, b2, w3, b3)


def reference_forward(x, params):
    """Pure-JAX reference with the same bf16-matmul / f32-accumulation math."""
    w1, b1, w2, b2, w3, b3 = params
    xf = x.reshape(-1, IN_DIM).astype(jnp.bfloat16)
    h1 = jnp.dot(xf, w1.astype(jnp.bfloat16), preferred_element_type=jnp.float32) + b1
    h1 = jnp.maximum(h1, 0.0).astype(jnp.bfloat16)
    h2 = jnp.dot(h1, w2.astype(jnp.bfloat16), preferred_element_type=jnp.float32) + b2
    h2 = jnp.maximum(h2, 0.0).astype(jnp.bfloat16)
    return jnp.dot(h2, w3.astype(jnp.bfloat16), preferred_element_type=jnp.float32) + b3


def reference_forward_f32(x, params):
    w1, b1, w2, b2, w3, b3 = params
    xf = x.reshape(-1, IN_DIM).astype(jnp.float32)
    h1 = jnp.maximum(xf @ w1 + b1, 0.0)
    h2 = jnp.maximum(h1 @ w2 + b2, 0.0)
    return h2 @ w3 + b3


if __name__ == "__main__":
    key = jax.random.PRNGKey(0)
    kx, kx2, kp = jax.random.split(key, 3)

    params = init_params(kp)

    # Small MNIST-like batch: (B=2, C=1, H=28, W=28) -> single full-batch block.
    x = jax.random.normal(kx, (2, 1, 28, 28), dtype=jnp.float32)
    out = jax.block_until_ready(simple_nn_forward(x, params))
    assert out.shape == (2, OUT_DIM), out.shape
    ref = reference_forward(x, params)
    assert jnp.allclose(out, ref, atol=1e-3, rtol=1e-3), "mismatch vs bf16 reference (B=2)"
    ref32 = reference_forward_f32(x, params)
    assert jnp.allclose(out, ref32, atol=5e-2, rtol=5e-2), "mismatch vs f32 reference (B=2)"

    # Batch that exercises multi-step grid + masked partial last block (B=40 -> tile 24, grid 2).
    x2 = jax.random.normal(kx2, (40, 1, 28, 28), dtype=jnp.float32)
    out2 = jax.block_until_ready(simple_nn_forward(x2, params))
    assert out2.shape == (40, OUT_DIM), out2.shape
    ref2 = reference_forward(x2, params)
    assert jnp.allclose(out2, ref2, atol=1e-3, rtol=1e-3), "mismatch vs bf16 reference (B=40)"

    print("KERNEL_OK")
</pallas_src>

<mosaic_0001>
module attributes {stable_mosaic.version = 11 : i64} {
  func.func @_mlp_kernel(%arg0: i32, %arg1: memref<2x784xf32, #tpu.memory_space<vmem>>, %arg2: memref<784x128xbf16, #tpu.memory_space<vmem>>, %arg3: memref<1x128xf32, #tpu.memory_space<vmem>>, %arg4: memref<128x64xbf16, #tpu.memory_space<vmem>>, %arg5: memref<1x64xf32, #tpu.memory_space<vmem>>, %arg6: memref<64x10xbf16, #tpu.memory_space<vmem>>, %arg7: memref<1x10xf32, #tpu.memory_space<vmem>>, %arg8: memref<2x10xf32, #tpu.memory_space<vmem>>) attributes {dimension_semantics = [#tpu.dimension_semantics<parallel>], iteration_bounds = array<i64: 1>, scalar_prefetch = 0 : i64, scratch_operands = 0 : i64, tpu.core_type = #tpu.core_type<tc>, window_params = [{transform_indices = @transform_0, window_bounds = array<i64: 2, 784>}, {pipeline_mode = #tpu.pipeline_mode<synchronous>, transform_indices = @transform_1, window_bounds = array<i64: 784, 128>}, {pipeline_mode = #tpu.pipeline_mode<synchronous>, transform_indices = @transform_2, window_bounds = array<i64: 1, 128>}, {pipeline_mode = #tpu.pipeline_mode<synchronous>, transform_indices = @transform_3, window_bounds = array<i64: 128, 64>}, {pipeline_mode = #tpu.pipeline_mode<synchronous>, transform_indices = @transform_4, window_bounds = array<i64: 1, 64>}, {pipeline_mode = #tpu.pipeline_mode<synchronous>, transform_indices = @transform_5, window_bounds = array<i64: 64, 10>}, {pipeline_mode = #tpu.pipeline_mode<synchronous>, transform_indices = @transform_6, window_bounds = array<i64: 1, 10>}, {transform_indices = @transform_7, window_bounds = array<i64: 2, 10>}]} {
    %c0 = arith.constant 0 : index
    %c0_0 = arith.constant 0 : index
    %0 = vector.load %arg1[%c0, %c0_0] : memref<2x784xf32, #tpu.memory_space<vmem>>, vector<2x784xf32>
    %1 = arith.truncf %0 : vector<2x784xf32> to vector<2x784xbf16>
    %c0_1 = arith.constant 0 : index
    %c0_2 = arith.constant 0 : index
    %2 = vector.load %arg2[%c0_1, %c0_2] : memref<784x128xbf16, #tpu.memory_space<vmem>>, vector<784x128xbf16>
    %cst = arith.constant dense<0.000000e+00> : vector<2x128xf32>
    %3 = tpu.matmul %1, %2, %cst {dimension_numbers = #tpu.dot_dimension_numbers<[1], [0], [0], [1], [0, 0, 1, 1], [], []>} : vector<2x784xbf16>, vector<784x128xbf16>, vector<2x128xf32> -> vector<2x128xf32>
    %c0_3 = arith.constant 0 : index
    %c0_4 = arith.constant 0 : index
    %4 = vector.load %arg3[%c0_3, %c0_4] : memref<1x128xf32, #tpu.memory_space<vmem>>, vector<1x128xf32>
    %5 = vector.broadcast %4 : vector<1x128xf32> to vector<2x128xf32>
    %6 = arith.addf %3, %5 : vector<2x128xf32>
    %cst_5 = arith.constant 0.000000e+00 : f32
    %7 = vector.broadcast %cst_5 : f32 to vector<2x128xf32>
    %8 = arith.maximumf %6, %7 : vector<2x128xf32>
    %9 = arith.truncf %8 : vector<2x128xf32> to vector<2x128xbf16>
    %c0_6 = arith.constant 0 : index
    %c0_7 = arith.constant 0 : index
    %10 = vector.load %arg4[%c0_6, %c0_7] : memref<128x64xbf16, #tpu.memory_space<vmem>>, vector<128x64xbf16>
    %cst_8 = arith.constant dense<0.000000e+00> : vector<2x64xf32>
    %11 = tpu.matmul %9, %10, %cst_8 {dimension_numbers = #tpu.dot_dimension_numbers<[1], [0], [0], [1], [0, 0, 1, 1], [], []>} : vector<2x128xbf16>, vector<128x64xbf16>, vector<2x64xf32> -> vector<2x64xf32>
    %c0_9 = arith.constant 0 : index
    %c0_10 = arith.constant 0 : index
    %12 = vector.load %arg5[%c0_9, %c0_10] : memref<1x64xf32, #tpu.memory_space<vmem>>, vector<1x64xf32>
    %13 = vector.broadcast %12 : vector<1x64xf32> to vector<2x64xf32>
    %14 = arith.addf %11, %13 : vector<2x64xf32>
    %cst_11 = arith.constant 0.000000e+00 : f32
    %15 = vector.broadcast %cst_11 : f32 to vector<2x64xf32>
    %16 = arith.maximumf %14, %15 : vector<2x64xf32>
    %17 = arith.truncf %16 : vector<2x64xf32> to vector<2x64xbf16>
    %c0_12 = arith.constant 0 : index
    %c0_13 = arith.constant 0 : index
    %18 = vector.load %arg6[%c0_12, %c0_13] : memref<64x10xbf16, #tpu.memory_space<vmem>>, vector<64x10xbf16>
    %cst_14 = arith.constant dense<0.000000e+00> : vector<2x10xf32>
    %19 = tpu.matmul %17, %18, %cst_14 {dimension_numbers = #tpu.dot_dimension_numbers<[1], [0], [0], [1], [0, 0, 1, 1], [], []>} : vector<2x64xbf16>, vector<64x10xbf16>, vector<2x10xf32> -> vector<2x10xf32>
    %c0_15 = arith.constant 0 : index
    %c0_16 = arith.constant 0 : index
    %20 = vector.load %arg7[%c0_15, %c0_16] : memref<1x10xf32, #tpu.memory_space<vmem>>, vector<1x10xf32>
    %21 = vector.broadcast %20 : vector<1x10xf32> to vector<2x10xf32>
    %22 = arith.addf %19, %21 : vector<2x10xf32>
    %c0_17 = arith.constant 0 : index
    %c0_18 = arith.constant 0 : index
    %23 = vector.load %arg8[%c0_17, %c0_18] : memref<2x10xf32, #tpu.memory_space<vmem>>, vector<2x10xf32>
    tpu.vector_store %arg8[%c0_17, %c0_18], %22 {strides = array<i32>} : memref<2x10xf32, #tpu.memory_space<vmem>>, vector<2x10xf32>,
    return
  }
  func.func @transform_0(%arg0: i32) -> (i32, i32) {
    %c0_i32 = arith.constant 0 : i32
    %c0_i32_0 = arith.constant 0 : i32
    return %arg0, %c0_i32 : i32, i32
  }
  func.func @transform_1(%arg0: i32) -> (i32, i32) {
    %c0_i32 = arith.constant 0 : i32
    %c0_i32_0 = arith.constant 0 : i32
    %c0_i32_1 = arith.constant 0 : i32
    return %c0_i32, %c0_i32_0 : i32, i32
  }
  func.func @transform_2(%arg0: i32) -> (i32, i32) {
    %c0_i32 = arith.constant 0 : i32
    %c0_i32_0 = arith.constant 0 : i32
    %c0_i32_1 = arith.constant 0 : i32
    return %c0_i32, %c0_i32_0 : i32, i32
  }
  func.func @transform_3(%arg0: i32) -> (i32, i32) {
    %c0_i32 = arith.constant 0 : i32
    %c0_i32_0 = arith.constant 0 : i32
    %c0_i32_1 = arith.constant 0 : i32
    return %c0_i32, %c0_i32_0 : i32, i32
  }
  func.func @transform_4(%arg0: i32) -> (i32, i32) {
    %c0_i32 = arith.constant 0 : i32
    %c0_i32_0 = arith.constant 0 : i32
    %c0_i32_1 = arith.constant 0 : i32
    return %c0_i32, %c0_i32_0 : i32, i32
  }
  func.func @transform_5(%arg0: i32) -> (i32, i32) {
    %c0_i32 = arith.constant 0 : i32
    %c0_i32_0 = arith.constant 0 : i32
    %c0_i32_1 = arith.constant 0 : i32
    return %c0_i32, %c0_i32_0 : i32, i32
  }
  func.func @transform_6(%arg0: i32) -> (i32, i32) {
    %c0_i32 = arith.constant 0 : i32
    %c0_i32_0 = arith.constant 0 : i32
    %c0_i32_1 = arith.constant 0 : i32
    return %c0_i32, %c0_i32_0 : i32, i32
  }
  func.func @transform_7(%arg0: i32) -> (i32, i32) {
    %c0_i32 = arith.constant 0 : i32
    %c0_i32_0 = arith.constant 0 : i32
    return %arg0, %c0_i32 : i32, i32
  }
}

</mosaic_0001>

<llo_original>
// kernel: simple_nn_forward.1
$region0: #{simple_nn_forward.1}
  #allocation0 [shape = 'u32[]', space=smem, size = 0x4, offset = 0x4, fixed_abs, tag = 'smem constant byte address 0x4 - core index']
  #allocation1 [shape = 'u32[72,128]{1,0:T(1,128)}', space=vmem, size = 0x9000, scoped, tag = 'internal scratch']
  %s0 = inlined_call_operand.vmem [shape: f32[2,784], index: 0, kind: input, shape index: {}]
  %s1 = inlined_call_operand.vmem [shape: bf16[784,128], index: 1, kind: input, shape index: {}]
  %s2 = inlined_call_operand.vmem [shape: f32[1,128], index: 2, kind: input, shape index: {}]
  %s3 = inlined_call_operand.vmem [shape: bf16[128,64], index: 3, kind: input, shape index: {}]
  %s4 = inlined_call_operand.vmem [shape: f32[1,64], index: 4, kind: input, shape index: {}]
  %s5 = inlined_call_operand.vmem [shape: bf16[64,10], index: 5, kind: input, shape index: {}]
  %s6 = inlined_call_operand.vmem [shape: f32[1,10], index: 6, kind: input, shape index: {}]
  %s7 = inlined_call_operand.hbm [shape: f32[2,10], index: 7, kind: output, shape index: {}]
  %s8 = sld [smem:[#allocation0]]
  $region38: #{simple_nn_forward.1} parent=0
    _
  %s10 = ssub.s32 1, %s8
  %s11 = scalar_select 0, %s10, %s8
  $region1: #{simple_nn_forward.1} parent=0
    #allocation2 [shape = 'u8[1024]{0}', space=vmem, size = 0x400, scoped, tag = 'output window, operand 0, single buffered']
    #allocation3 [shape = 's32[1]{0}', space=sflag, size = 0x4, scoped, tag = 'scoped memory for simple_nn_forward.1']
    %12 = vsyncpa [#allocation3], 0
    // Predicated region
    $region2: #{simple_nn_forward.1} parent=1 // pred_check
      _
    $region3: #{simple_nn_forward.1} parent=1 // pred_check_branch
      %14 = sbr.rel (0) target = $region5
    $region4: #{simple_nn_forward.1} parent=1 // pred_region
      _
    $region5: #{simple_nn_forward.1} parent=1 // pred_fallthru
      _
    // Predicated region
    $region6: #{simple_nn_forward.1} parent=1 // pred_check
      _
    $region7: #{simple_nn_forward.1} parent=1 // pred_check_branch
      %16 = sbr.rel (0) target = $region9
    $region8: #{simple_nn_forward.1} parent=1 // pred_region
      _
    $region9: #{simple_nn_forward.1} parent=1 // pred_fallthru
      _
    // Predicated region
    $region10: #{simple_nn_forward.1} parent=1 // pred_check
      _
    $region11: #{simple_nn_forward.1} parent=1 // pred_check_branch
      %18 = sbr.rel (0) target = $region13
    $region12: #{simple_nn_forward.1} parent=1 // pred_region
      _
    $region13: #{simple_nn_forward.1} parent=1 // pred_fallthru
      _
    // Predicated region
    $region14: #{simple_nn_forward.1} parent=1 // pred_check
      _
    $region15: #{simple_nn_forward.1} parent=1 // pred_check_branch
      %20 = sbr.rel (0) target = $region17
    $region16: #{simple_nn_forward.1} parent=1 // pred_region
      _
    $region17: #{simple_nn_forward.1} parent=1 // pred_fallthru
      _
    // Predicated region
    $region18: #{simple_nn_forward.1} parent=1 // pred_check
      _
    $region19: #{simple_nn_forward.1} parent=1 // pred_check_branch
      %22 = sbr.rel (0) target = $region21
    $region20: #{simple_nn_forward.1} parent=1 // pred_region
      _
    $region21: #{simple_nn_forward.1} parent=1 // pred_fallthru
      _
    // Predicated region
    $region22: #{simple_nn_forward.1} parent=1 // pred_check
      _
    $region23: #{simple_nn_forward.1} parent=1 // pred_check_branch
      %24 = sbr.rel (0) target = $region25
    $region24: #{simple_nn_forward.1} parent=1 // pred_region
      _
    $region25: #{simple_nn_forward.1} parent=1 // pred_fallthru
      _
    // Predicated region
    $region26: #{simple_nn_forward.1} parent=1 // pred_check
      _
    $region27: #{simple_nn_forward.1} parent=1 // pred_check_branch
      %26 = sbr.rel (0) target = $region29
    $region28: #{simple_nn_forward.1} parent=1 // pred_region
      _
    $region29: #{simple_nn_forward.1} parent=1 // pred_fallthru
      _
    %v28 = vld [vmem:[%s0] sm:$0xff]
    %v29 = vld [vmem:[%s0 + $0x8] sm:$0x3f]
    %32 = vst [vmem:[#allocation1] ss:$4 sm:$0xff] %v28
    %s33 = scalar_lea.vmem [#allocation1], 32
    %34 = vst [vmem:[%s33] ss:$4 sm:$0xff] %v29
    %v35 = vld.sshfl [vmem:[#allocation1] sm:$0xff pattern:$0x73625140]
    %v36 = vld.sshfl [vmem:[#allocation1 + $0x8] sm:$0xff pattern:$0x73625140]
    %v37 = vld.sshfl [vmem:[#allocation1 + $0x10] sm:$0xff pattern:$0x73625140]
    %v38 = vld.sshfl [vmem:[#allocation1 + $0x18] sm:$0xff pattern:$0x73625140]
    %v39 = vld.sshfl [vmem:[#allocation1 + $0x20] sm:$0xff pattern:$0x73625140]
    %v40 = vld.sshfl [vmem:[#allocation1 + $0x28] sm:$0xff pattern:$0x73625140]
    %v41 = vld.sshfl [vmem:[#allocation1 + $0x30] sm:$0xff pattern:$0x73625140]
    %v49 = vpack.c.bf16 %v35, %v35
    %v50 = vpack.c.bf16 %v36, %v36
    %v51 = vpack.c.bf16 %v37, %v37
    %v52 = vpack.c.bf16 %v38, %v38
    %v53 = vpack.c.bf16 %v39, %v39
    %v54 = vpack.c.bf16 %v40, %v40
    %v55 = vpack.c.bf16 %v41, %v41
    %v56 = vld [vmem:[%s1] sm:$0xf]
    %v57 = vld [vmem:[%s1 + $0x4] sm:$0xf]
    %v58 = vld [vmem:[%s1 + $0x8] sm:$0xf]
    %v59 = vld [vmem:[%s1 + $0xc] sm:$0xf]
    %v60 = vld [vmem:[%s1 + $0x10] sm:$0xf]
    %v61 = vld [vmem:[%s1 + $0x14] sm:$0xf]
    %v62 = vld [vmem:[%s1 + $0x18] sm:$0xf]
    %v63 = vld [vmem:[%s1 + $0x1c] sm:$0xf]
    %v64 = vld [vmem:[%s1 + $0x20] sm:$0xf]
    %v65 = vld [vmem:[%s1 + $0x24] sm:$0xf]
    %v66 = vld [vmem:[%s1 + $0x28] sm:$0xf]
    %v67 = vld [vmem:[%s1 + $0x2c] sm:$0xf]
    %v68 = vld [vmem:[%s1 + $0x30] sm:$0xf]
    %v69 = vld [vmem:[%s1 + $0x34] sm:$0xf]
    %v70 = vld [vmem:[%s1 + $0x38] sm:$0xf]
    %v71 = vld [vmem:[%s1 + $0x3c] sm:$0xf]
    %v72 = vld [vmem:[%s1 + $0x40] sm:$0xf]
    %v73 = vld [vmem:[%s1 + $0x44] sm:$0xf]
    %v74 = vld [vmem:[%s1 + $0x48] sm:$0xf]
    %v75 = vld [vmem:[%s1 + $0x4c] sm:$0xf]
    %v76 = vld [vmem:[%s1 + $0x50] sm:$0xf]
    %v77 = vld [vmem:[%s1 + $0x54] sm:$0xf]
    %v78 = vld [vmem:[%s1 + $0x58] sm:$0xf]
    %v79 = vld [vmem:[%s1 + $0x5c] sm:$0xf]
    %v80 = vld [vmem:[%s1 + $0x60] sm:$0xf]
    %v81 = vld [vmem:[%s1 + $0x64] sm:$0xf]
    %v82 = vld [vmem:[%s1 + $0x68] sm:$0xf]
    %v83 = vld [vmem:[%s1 + $0x6c] sm:$0xf]
    %v84 = vld [vmem:[%s1 + $0x70] sm:$0xf]
    %v85 = vld [vmem:[%s1 + $0x74] sm:$0xf]
    %v86 = vld [vmem:[%s1 + $0x78] sm:$0xf]
    %v87 = vld [vmem:[%s1 + $0x7c] sm:$0xf]
    %v88 = vld [vmem:[%s1 + $0x80] sm:$0xf]
    %v89 = vld [vmem:[%s1 + $0x84] sm:$0xf]
    %v90 = vld [vmem:[%s1 + $0x88] sm:$0xf]
    %v91 = vld [vmem:[%s1 + $0x8c] sm:$0xf]
    %v92 = vld [vmem:[%s1 + $0x90] sm:$0xf]
    %v93 = vld [vmem:[%s1 + $0x94] sm:$0xf]
    %v94 = vld [vmem:[%s1 + $0x98] sm:$0xf]
    %v95 = vld [vmem:[%s1 + $0x9c] sm:$0xf]
    %v96 = vld [vmem:[%s1 + $0xa0] sm:$0xf]
    %v97 = vld [vmem:[%s1 + $0xa4] sm:$0xf]
    %v98 = vld [vmem:[%s1 + $0xa8] sm:$0xf]
    %v99 = vld [vmem:[%s1 + $0xac] sm:$0xf]
    %v100 = vld [vmem:[%s1 + $0xb0] sm:$0xf]
    %v101 = vld [vmem:[%s1 + $0xb4] sm:$0xf]
    %v102 = vld [vmem:[%s1 + $0xb8] sm:$0xf]
    %v103 = vld [vmem:[%s1 + $0xbc] sm:$0xf]
    %v104 = vld [vmem:[%s1 + $0xc0] sm:$0xf]
    %v105 = vld [vmem:[%s1 + $0xc4] sm:$0xf]
    %v106 = vld [vmem:[%s1 + $0xc8] sm:$0xf]
    %v107 = vld [vmem:[%s1 + $0xcc] sm:$0xf]
    %v108 = vld [vmem:[%s1 + $0xd0] sm:$0xf]
    %v109 = vld [vmem:[%s1 + $0xd4] sm:$0xf]
    %v110 = vld [vmem:[%s1 + $0xd8] sm:$0xf]
    %v111 = vld [vmem:[%s1 + $0xdc] sm:$0xf]
    %v112 = vld [vmem:[%s1 + $0xe0] sm:$0xf]
    %v113 = vld [vmem:[%s1 + $0xe4] sm:$0xf]
    %v114 = vld [vmem:[%s1 + $0xe8] sm:$0xf]
    %v115 = vld [vmem:[%s1 + $0xec] sm:$0xf]
    %v116 = vld [vmem:[%s1 + $0xf0] sm:$0xf]
    %v117 = vld [vmem:[%s1 + $0xf4] sm:$0xf]
    %v118 = vld [vmem:[%s1 + $0xf8] sm:$0xf]
    %v119 = vld [vmem:[%s1 + $0xfc] sm:$0xf]
    %v120 = vld [vmem:[%s1 + $0x100] sm:$0xf]
    %v121 = vld [vmem:[%s1 + $0x104] sm:$0xf]
    %v122 = vld [vmem:[%s1 + $0x108] sm:$0xf]
    %v123 = vld [vmem:[%s1 + $0x10c] sm:$0xf]
    %v124 = vld [vmem:[%s1 + $0x110] sm:$0xf]
    %v125 = vld [vmem:[%s1 + $0x114] sm:$0xf]
    %v126 = vld [vmem:[%s1 + $0x118] sm:$0xf]
    %v127 = vld [vmem:[%s1 + $0x11c] sm:$0xf]
    %v128 = vld [vmem:[%s1 + $0x120] sm:$0xf]
    %v129 = vld [vmem:[%s1 + $0x124] sm:$0xf]
    %v130 = vld [vmem:[%s1 + $0x128] sm:$0xf]
    %v131 = vld [vmem:[%s1 + $0x12c] sm:$0xf]
    %v132 = vld [vmem:[%s1 + $0x130] sm:$0xf]
    %v133 = vld [vmem:[%s1 + $0x134] sm:$0xf]
    %v134 = vld [vmem:[%s1 + $0x138] sm:$0xf]
    %v135 = vld [vmem:[%s1 + $0x13c] sm:$0xf]
    %v136 = vld [vmem:[%s1 + $0x140] sm:$0xf]
    %v137 = vld [vmem:[%s1 + $0x144] sm:$0xf]
    %v138 = vld [vmem:[%s1 + $0x148] sm:$0xf]
    %v139 = vld [vmem:[%s1 + $0x14c] sm:$0xf]
    %v140 = vld [vmem:[%s1 + $0x150] sm:$0xf]
    %v141 = vld [vmem:[%s1 + $0x154] sm:$0xf]
    %v142 = vld [vmem:[%s1 + $0x158] sm:$0xf]
    %v143 = vld [vmem:[%s1 + $0x15c] sm:$0xf]
    %v144 = vld [vmem:[%s1 + $0x160] sm:$0xf]
    %v145 = vld [vmem:[%s1 + $0x164] sm:$0xf]
    %v146 = vld [vmem:[%s1 + $0x168] sm:$0xf]
    %v147 = vld [vmem:[%s1 + $0x16c] sm:$0xf]
    %v148 = vld [vmem:[%s1 + $0x170] sm:$0xf]
    %v149 = vld [vmem:[%s1 + $0x174] sm:$0xf]
    %v150 = vld [vmem:[%s1 + $0x178] sm:$0xf]
    %v151 = vld [vmem:[%s1 + $0x17c] sm:$0xf]
    %v152 = vld [vmem:[%s1 + $0x180] sm:$0xf]
    %v153 = vld [vmem:[%s1 + $0x184] sm:$0xf]
    %v154 = vld [vmem:[%s2] sm:$0x1]
    %v156 = vperm.slane %v154, 0
    %v256 = vunpack.c.l.b16 %v56
    %v257 = vunpack.c.l.b16 %v57
    %v258 = vunpack.c.l.b16 %v58
    %v259 = vunpack.c.l.b16 %v59
    %v260 = vunpack.c.l.b16 %v60
    %v261 = vunpack.c.l.b16 %v61
    %v262 = vunpack.c.l.b16 %v62
    %v263 = vunpack.c.l.b16 %v63
    %v264 = vunpack.c.l.b16 %v64
    %v265 = vunpack.c.l.b16 %v65
    %v266 = vunpack.c.l.b16 %v66
    %v267 = vunpack.c.l.b16 %v67
    %v268 = vunpack.c.l.b16 %v68
    %v269 = vunpack.c.l.b16 %v69
    %v270 = vunpack.c.l.b16 %v70
    %v271 = vunpack.c.l.b16 %v71
    %v272 = vunpack.c.l.b16 %v72
    %v273 = vunpack.c.l.b16 %v73
    %v274 = vunpack.c.l.b16 %v74
    %v275 = vunpack.c.l.b16 %v75
    %v276 = vunpack.c.l.b16 %v76
    %v277 = vunpack.c.l.b16 %v77
    %v278 = vunpack.c.l.b16 %v78
    %v279 = vunpack.c.l.b16 %v79
    %v280 = vunpack.c.l.b16 %v80
    %v281 = vunpack.c.l.b16 %v81
    %v282 = vunpack.c.l.b16 %v82
    %v283 = vunpack.c.l.b16 %v83
    %v284 = vunpack.c.l.b16 %v84
    %v285 = vunpack.c.l.b16 %v85
    %v286 = vunpack.c.l.b16 %v86
    %v287 = vunpack.c.l.b16 %v87
    %v288 = vunpack.c.l.b16 %v88
    %v289 = vunpack.c.l.b16 %v89
    %v290 = vunpack.c.l.b16 %v90
    %v291 = vunpack.c.l.b16 %v91
    %v292 = vunpack.c.l.b16 %v92
    %v293 = vunpack.c.l.b16 %v93
    %v294 = vunpack.c.l.b16 %v94
    %v295 = vunpack.c.l.b16 %v95
    %v296 = vunpack.c.l.b16 %v96
    %v297 = vunpack.c.l.b16 %v97
    %v298 = vunpack.c.l.b16 %v98
    %v299 = vunpack.c.l.b16 %v99
    %v300 = vunpack.c.l.b16 %v100
    %v301 = vunpack.c.l.b16 %v101
    %v302 = vunpack.c.l.b16 %v102
    %v303 = vunpack.c.l.b16 %v103
    %v304 = vunpack.c.l.b16 %v104
    %v305 = vunpack.c.l.b16 %v105
    %v306 = vunpack.c.l.b16 %v106
    %v307 = vunpack.c.l.b16 %v107
    %v308 = vunpack.c.l.b16 %v108
    %v309 = vunpack.c.l.b16 %v109
    %v310 = vunpack.c.l.b16 %v110
    %v311 = vunpack.c.l.b16 %v111
    %v312 = vunpack.c.l.b16 %v112
    %v313 = vunpack.c.l.b16 %v113
    %v314 = vunpack.c.l.b16 %v114
    %v315 = vunpack.c.l.b16 %v115
    %v316 = vunpack.c.l.b16 %v116
    %v317 = vunpack.c.l.b16 %v117
    %v318 = vunpack.c.l.b16 %v118
    %v319 = vunpack.c.l.b16 %v119
    %v320 = vunpack.c.l.b16 %v120
    %v321 = vunpack.c.l.b16 %v121
    %v322 = vunpack.c.l.b16 %v122
    %v323 = vunpack.c.l.b16 %v123
    %v324 = vunpack.c.l.b16 %v124
    %v325 = vunpack.c.l.b16 %v125
    %v326 = vunpack.c.l.b16 %v126
    %v327 = vunpack.c.l.b16 %v127
    %v328 = vunpack.c.l.b16 %v128
    %v329 = vunpack.c.l.b16 %v129
    %v330 = vunpack.c.l.b16 %v130
    %v331 = vunpack.c.l.b16 %v131
    %v332 = vunpack.c.l.b16 %v132
    %v333 = vunpack.c.l.b16 %v133
    %v334 = vunpack.c.l.b16 %v134
    %v335 = vunpack.c.l.b16 %v135
    %v336 = vunpack.c.l.b16 %v136
    %v337 = vunpack.c.l.b16 %v137
    %v338 = vunpack.c.l.b16 %v138
    %v339 = vunpack.c.l.b16 %v139
    %v340 = vunpack.c.l.b16 %v140
    %v341 = vunpack.c.l.b16 %v141
    %v342 = vunpack.c.l.b16 %v142
    %v343 = vunpack.c.l.b16 %v143
    %v344 = vunpack.c.l.b16 %v144
    %v345 = vunpack.c.l.b16 %v145
    %v346 = vunpack.c.l.b16 %v146
    %v347 = vunpack.c.l.b16 %v147
    %v348 = vunpack.c.l.b16 %v148
    %v349 = vunpack.c.l.b16 %v149
    %v350 = vunpack.c.l.b16 %v150
    %v351 = vunpack.c.l.b16 %v151
    %v352 = vunpack.c.l.b16 %v152
    %v353 = vunpack.c.l.b16 %v153
    %v354 = vpack.c.b16 %v257, %v256
    %v355 = vpack.c.b16 %v259, %v258
    %v356 = vpack.c.b16 %v261, %v260
    %v357 = vpack.c.b16 %v263, %v262
    %v358 = vpack.c.b16 %v265, %v264
    %v359 = vpack.c.b16 %v267, %v266
    %v360 = vpack.c.b16 %v269, %v268
    %v361 = vpack.c.b16 %v271, %v270
    %v362 = vpack.c.b16 %v273, %v272
    %v363 = vpack.c.b16 %v275, %v274
    %v364 = vpack.c.b16 %v277, %v276
    %v365 = vpack.c.b16 %v279, %v278
    %v366 = vpack.c.b16 %v281, %v280
    %v367 = vpack.c.b16 %v283, %v282
    %v368 = vpack.c.b16 %v285, %v284
    %v369 = vpack.c.b16 %v287, %v286
    %v370 = vpack.c.b16 %v289, %v288
    %v371 = vpack.c.b16 %v291, %v290
    %v372 = vpack.c.b16 %v293, %v292
    %v373 = vpack.c.b16 %v295, %v294
    %v374 = vpack.c.b16 %v297, %v296
    %v375 = vpack.c.b16 %v299, %v298
    %v376 = vpack.c.b16 %v301, %v300
    %v377 = vpack.c.b16 %v303, %v302
    %v378 = vpack.c.b16 %v305, %v304
    %v379 = vpack.c.b16 %v307, %v306
    %v380 = vpack.c.b16 %v309, %v308
    %v381 = vpack.c.b16 %v311, %v310
    %v382 = vpack.c.b16 %v313, %v312
    %v383 = vpack.c.b16 %v315, %v314
    %v384 = vpack.c.b16 %v317, %v316
    %v385 = vpack.c.b16 %v319, %v318
    %v386 = vpack.c.b16 %v321, %v320
    %v387 = vpack.c.b16 %v323, %v322
    %v388 = vpack.c.b16 %v325, %v324
    %v389 = vpack.c.b16 %v327, %v326
    %v390 = vpack.c.b16 %v329, %v328
    %v391 = vpack.c.b16 %v331, %v330
    %v392 = vpack.c.b16 %v333, %v332
    %v393 = vpack.c.b16 %v335, %v334
    %v394 = vpack.c.b16 %v337, %v336
    %v395 = vpack.c.b16 %v339, %v338
    %v396 = vpack.c.b16 %v341, %v340
    %v397 = vpack.c.b16 %v343, %v342
    %v398 = vpack.c.b16 %v345, %v344
    %v399 = vpack.c.b16 %v347, %v346
    %v400 = vpack.c.b16 %v349, %v348
    %v401 = vpack.c.b16 %v351, %v350
    %v402 = vpack.c.b16 %v353, %v352
    %vm452 = vcmask 130048
    %v454 = vsel %vm452, %v55, 0
    %456 = vmatpush.bf16.msra.mxu0 %v361
    %457 = vmatpush.bf16.msra.mxu0 %v360
    %458 = vmatpush.bf16.msra.mxu0 %v359
    %459 = vmatpush.bf16.msra.mxu0 %v358
    %460 = vmatpush.bf16.msra.mxu0 %v357
    %461 = vmatpush.bf16.msra.mxu0 %v356
    %462 = vmatpush.bf16.msra.mxu0 %v355
    %463 = vmatpush.bf16.msra.mxu0 %v354
    %464 = vmatmul.bf16.gmra.mxu0 %v49
    %v465 = vpop.f32.mrf.mxu0
    %v466 = vadd.f32 %v156, %v465
    %v467 = vpop.f32.mrf.mxu0
    %468 = vdwg.mxu0
    %469 = vmatpush.bf16.msra.mxu0 %v369
    %470 = vmatpush.bf16.msra.mxu0 %v368
    %471 = vmatpush.bf16.msra.mxu0 %v367
    %472 = vmatpush.bf16.msra.mxu0 %v366
    %473 = vmatpush.bf16.msra.mxu0 %v365
    %474 = vmatpush.bf16.msra.mxu0 %v364
    %475 = vmatpush.bf16.msra.mxu0 %v363
    %476 = vmatpush.bf16.msra.mxu0 %v362
    %477 = vmatmul.bf16.gmra.mxu0 %v50
    %v478 = vpop.f32.mrf.mxu0
    %v479 = vadd.f32 %v466, %v478
    %v480 = vpop.f32.mrf.mxu0
    %481 = vdwg.mxu0
    %482 = vmatpush.bf16.msra.mxu0 %v377
    %483 = vmatpush.bf16.msra.mxu0 %v376
    %484 = vmatpush.bf16.msra.mxu0 %v375
    %485 = vmatpush.bf16.msra.mxu0 %v374
    %486 = vmatpush.bf16.msra.mxu0 %v373
    %487 = vmatpush.bf16.msra.mxu0 %v372
    %488 = vmatpush.bf16.msra.mxu0 %v371
    %489 = vmatpush.bf16.msra.mxu0 %v370
    %490 = vmatmul.bf16.gmra.mxu0 %v51
    %v491 = vpop.f32.mrf.mxu0
    %v492 = vadd.f32 %v479, %v491
    %v493 = vpop.f32.mrf.mxu0
    %494 = vdwg.mxu0
    %495 = vmatpush.bf16.msra.mxu0 %v385
    %496 = vmatpush.bf16.msra.mxu0 %v384
    %497 = vmatpush.bf16.msra.mxu0 %v383
    %498 = vmatpush.bf16.msra.mxu0 %v382
    %499 = vmatpush.bf16.msra.mxu0 %v381
    %500 = vmatpush.bf16.msra.mxu0 %v380
    %501 = vmatpush.bf16.msra.mxu0 %v379
    %502 = vmatpush.bf16.msra.mxu0 %v378
    %503 = vmatmul.bf16.gmra.mxu0 %v52
    %v504 = vpop.f32.mrf.mxu0
    %v505 = vadd.f32 %v492, %v504
    %v506 = vpop.f32.mrf.mxu0
    %507 = vdwg.mxu0
    %508 = vmatpush.bf16.msra.mxu0 %v393
    %509 = vmatpush.bf16.msra.mxu0 %v392
    %510 = vmatpush.bf16.msra.mxu0 %v391
    %511 = vmatpush.bf16.msra.mxu0 %v390
    %512 = vmatpush.bf16.msra.mxu0 %v389
    %513 = vmatpush.bf16.msra.mxu0 %v388
    %514 = vmatpush.bf16.msra.mxu0 %v387
    %515 = vmatpush.bf16.msra.mxu0 %v386
    %516 = vmatmul.bf16.gmra.mxu0 %v53
    %v517 = vpop.f32.mrf.mxu0
    %v518 = vadd.f32 %v505, %v517
    %v519 = vpop.f32.mrf.mxu0
    %520 = vdwg.mxu0
    %521 = vmatpush.bf16.msra.mxu0 %v401
    %522 = vmatpush.bf16.msra.mxu0 %v400
    %523 = vmatpush.bf16.msra.mxu0 %v399
    %524 = vmatpush.bf16.msra.mxu0 %v398
    %525 = vmatpush.bf16.msra.mxu0 %v397
    %526 = vmatpush.bf16.msra.mxu0 %v396
    %527 = vmatpush.bf16.msra.mxu0 %v395
    %528 = vmatpush.bf16.msra.mxu0 %v394
    %529 = vmatmul.bf16.gmra.mxu0 %v54
    %v530 = vpop.f32.mrf.mxu0
    %v531 = vadd.f32 %v518, %v530
    %v532 = vpop.f32.mrf.mxu0
    %533 = vdwg.mxu0
    %534 = vmatpush.bf16.msra.mxu0 0
    %535 = vmatpush.bf16.msra.mxu0 0
    %536 = vmatpush.bf16.msra.mxu0 0
    %537 = vmatpush.bf16.msra.mxu0 0
    %538 = vmatpush.bf16.msra.mxu0 0
    %539 = vmatpush.bf16.msra.mxu0 0
    %540 = vmatpush.bf16.msra.mxu0 0
    %541 = vmatpush.bf16.msra.mxu0 %v402
    %542 = vmatmul.bf16.gmra.mxu0 %v454
    %v543 = vpop.f32.mrf.mxu0
    %v544 = vadd.f32 %v531, %v543
    %v545 = vpop.f32.mrf.mxu0
    %546 = vdwg.mxu0
    %v547 = vmax.f32 %v544, 0.0
    %v548 = vpack.c.bf16 %v547, %v547
    %v549 = vld [vmem:[%s3] sm:$0xf]
    %v550 = vld [vmem:[%s3 + $0x4] sm:$0xf]
    %v551 = vld [vmem:[%s3 + $0x8] sm:$0xf]
    %v552 = vld [vmem:[%s3 + $0xc] sm:$0xf]
    %v553 = vld [vmem:[%s3 + $0x10] sm:$0xf]
    %v554 = vld [vmem:[%s3 + $0x14] sm:$0xf]
    %v555 = vld [vmem:[%s3 + $0x18] sm:$0xf]
    %v556 = vld [vmem:[%s3 + $0x1c] sm:$0xf]
    %v557 = vld [vmem:[%s3 + $0x20] sm:$0xf]
    %v558 = vld [vmem:[%s3 + $0x24] sm:$0xf]
    %v559 = vld [vmem:[%s3 + $0x28] sm:$0xf]
    %v560 = vld [vmem:[%s3 + $0x2c] sm:$0xf]
    %v561 = vld [vmem:[%s3 + $0x30] sm:$0xf]
    %v562 = vld [vmem:[%s3 + $0x34] sm:$0xf]
    %v563 = vld [vmem:[%s3 + $0x38] sm:$0xf]
    %v564 = vld [vmem:[%s3 + $0x3c] sm:$0xf]
    %v565 = vld [vmem:[%s4] sm:$0x1]
    %v567 = vperm.slane %v565, 0
    %v585 = vunpack.c.l.b16 %v549
    %v586 = vunpack.c.l.b16 %v550
    %v587 = vunpack.c.l.b16 %v551
    %v588 = vunpack.c.l.b16 %v552
    %v589 = vunpack.c.l.b16 %v553
    %v590 = vunpack.c.l.b16 %v554
    %v591 = vunpack.c.l.b16 %v555
    %v592 = vunpack.c.l.b16 %v556
    %v593 = vunpack.c.l.b16 %v557
    %v594 = vunpack.c.l.b16 %v558
    %v595 = vunpack.c.l.b16 %v559
    %v596 = vunpack.c.l.b16 %v560
    %v597 = vunpack.c.l.b16 %v561
    %v598 = vunpack.c.l.b16 %v562
    %v599 = vunpack.c.l.b16 %v563
    %v600 = vunpack.c.l.b16 %v564
    %v601 = vpack.c.b16 %v586, %v585
    %v602 = vpack.c.b16 %v588, %v587
    %v603 = vpack.c.b16 %v590, %v589
    %v604 = vpack.c.b16 %v592, %v591
    %v605 = vpack.c.b16 %v594, %v593
    %v606 = vpack.c.b16 %v596, %v595
    %v607 = vpack.c.b16 %v598, %v597
    %v608 = vpack.c.b16 %v600, %v599
    %617 = vmatpush.bf16.msra.mxu0 %v608
    %618 = vmatpush.bf16.msra.mxu0 %v607
    %619 = vmatpush.bf16.msra.mxu0 %v606
    %620 = vmatpush.bf16.msra.mxu0 %v605
    %621 = vmatpush.bf16.msra.mxu0 %v604
    %622 = vmatpush.bf16.msra.mxu0 %v603
    %623 = vmatpush.bf16.msra.mxu0 %v602
    %624 = vmatpush.bf16.msra.mxu0 %v601
    %625 = vmatmul.bf16.gmra.mxu0 %v548
    %v626 = vpop.f32.mrf.mxu0
    %v627 = vadd.f32 %v567, %v626
    %v628 = vpop.f32.mrf.mxu0
    %629 = vdwg.mxu0
    %v630 = vmax.f32 %v627, 0.0
    %v631 = vpack.c.bf16 %v630, %v630
    %v632 = vld [vmem:[%s5] sm:$0xf]
    %v633 = vld [vmem:[%s5 + $0x4] sm:$0xf]
    %v634 = vld [vmem:[%s5 + $0x8] sm:$0xf]
    %v635 = vld [vmem:[%s5 + $0xc] sm:$0xf]
    %v636 = vld [vmem:[%s5 + $0x10] sm:$0xf]
    %v637 = vld [vmem:[%s5 + $0x14] sm:$0xf]
    %v638 = vld [vmem:[%s5 + $0x18] sm:$0xf]
    %v639 = vld [vmem:[%s5 + $0x1c] sm:$0xf]
    %v640 = vld [vmem:[%s6] sm:$0x1]
    %v642 = vperm.slane %v640, 0
    %v652 = vunpack.c.l.b16 %v632
    %v653 = vunpack.c.l.b16 %v633
    %v654 = vunpack.c.l.b16 %v634
    %v655 = vunpack.c.l.b16 %v635
    %v656 = vunpack.c.l.b16 %v636
    %v657 = vunpack.c.l.b16 %v637
    %v658 = vunpack.c.l.b16 %v638
    %v659 = vunpack.c.l.b16 %v639
    %v660 = vpack.c.b16 %v653, %v652
    %v661 = vpack.c.b16 %v655, %v654
    %v662 = vpack.c.b16 %v657, %v656
    %v663 = vpack.c.b16 %v659, %v658
    %vm668 = vcmask 523264
    %v670 = vsel %vm668, %v631, 0
    %672 = vmatpush.bf16.msra.mxu0 0
    %673 = vmatpush.bf16.msra.mxu0 0
    %674 = vmatpush.bf16.msra.mxu0 0
    %675 = vmatpush.bf16.msra.mxu0 0
    %676 = vmatpush.bf16.msra.mxu0 %v663
    %677 = vmatpush.bf16.msra.mxu0 %v662
    %678 = vmatpush.bf16.msra.mxu0 %v661
    %679 = vmatpush.bf16.msra.mxu0 %v660
    %680 = vmatmul.bf16.gmra.mxu0 %v670
    %v681 = vpop.f32.mrf.mxu0
    %v682 = vadd.f32 %v642, %v681
    %v683 = vpop.f32.mrf.mxu0
    %684 = vdwg.mxu0
    %vm685 = vcmask 74752
    %686 = vst.msk [vmem:[#allocation2] sm:$0x3] %vm685, %v682
    // Predicated region
    $region30: #{simple_nn_forward.1} parent=1 // pred_check
      _
    $region31: #{simple_nn_forward.1} parent=1 // pred_check_branch
      %688 = sbr.rel (0) target = $region33
    $region32: #{simple_nn_forward.1} parent=1 // pred_region
      %690 = vsyncadd [#allocation3], 0
      %s692 = sshll.u32 [#allocation2], 4
      %s693 = int_to_ptr.vmem [resolvable:$true] %s692
      %s694 = sshll.u32 %s7, 4
      %s695 = int_to_ptr.hbm [resolvable:$true] %s694
      %697 = dma.vmem_to_hbm [thread:$0]  %s693, 32, %s695, [#allocation3]
    $region33: #{simple_nn_forward.1} parent=1 // pred_fallthru
      _
    // Predicated region
    $region34: #{simple_nn_forward.1} parent=1 // pred_check
      _
    $region35: #{simple_nn_forward.1} parent=1 // pred_check_branch
      %699 = sbr.rel (0) target = $region37
    $region36: #{simple_nn_forward.1} parent=1 // pred_region
      %701 = dma.done [#allocation3], 32
    $region37: #{simple_nn_forward.1} parent=1 // pred_fallthru
      _
    %702 = vsyncpa [#allocation3], 1

</llo_original>
